<compile_context>
chip_gen: v6e
topology: v6e:2x2x1
jax: 0.10.0
libtpu: 0.0.40
codegen_flags: <defaults>
</compile_context>

<pallas_src>
import jax
import jax.numpy as jnp
from jax.experimental import pallas as pl
from jax.experimental.pallas import tpu as pltpu

_LANES = 128  # TPU vreg lane width; keep the last dim lane-dense.


def _round_up(x: int, m: int) -> int:
    return ((x + m - 1) // m) * m


def _make_rank_loss_kernel(margin: float, batch: int, tile_rows: int,
                           tiles_per_core: int, padded_elems: int):
    tile_elems = tile_rows * _LANES
    need_mask = padded_elems != batch

    def kernel(p1_ref, p2_ref, t1_ref, t2_ref, out_ref, acc_ref):
        c = pl.program_id(0)   # core-split axis ("parallel")
        i = pl.program_id(1)   # row-tile axis  ("arbitrary")

        @pl.when(i == 0)
        def _():
            acc_ref[...] = jnp.zeros_like(acc_ref)

        p1 = p1_ref[...].astype(jnp.float32)
        p2 = p2_ref[...].astype(jnp.float32)
        t1 = t1_ref[...]
        t2 = t2_ref[...]

        # margin_ranking_loss with target = +1 (t1 >= t2) / -1 (t1 < t2):
        #   elem = max(0, -target * (p1 - p2) + margin)
        # implemented without materializing `target`.
        diff = p1 - p2
        flipped = jnp.where(t1 < t2, diff, -diff)
        elem = jnp.maximum(flipped + jnp.float32(margin), jnp.float32(0.0))

        def _accumulate(e):
            # (tile_rows, 128) -> (tile_rows//8, 8, 128); sum over the leading
            # axis is pure vreg-wise VPU adds into the (8, 128) accumulator.
            acc_ref[...] += e.reshape(-1, 8, _LANES).sum(axis=0)

        if need_mask:
            # Only tiles that actually contain padded elements pay for the mask.
            # int32 index math: fine for batch < 2**31 elements.
            base = (c * tiles_per_core + i) * tile_elems

            @pl.when(base + tile_elems <= batch)
            def _():
                _accumulate(elem)

            @pl.when(base + tile_elems > batch)
            def _():
                row = jax.lax.broadcasted_iota(jnp.int32, (tile_rows, _LANES), 0)
                lane = jax.lax.broadcasted_iota(jnp.int32, (tile_rows, _LANES), 1)
                local = row * _LANES + lane
                keep = local < (batch - base)
                _accumulate(jnp.where(keep, elem, jnp.float32(0.0)))
        else:
            _accumulate(elem)

        @pl.when(i == tiles_per_core - 1)
        def _():
            out_ref[0] = acc_ref[...]

    return kernel


def rank_loss(y_pred, y_true, margin: float, *,
              max_tile_rows: int = 2048, num_cores: int = 2):
    """y_pred, y_true: tuples of (B, 1) (or (B,)) arrays. Returns scalar f32 loss."""
    p1, p2 = y_pred
    t1, t2 = y_true
    batch = int(p1.reshape(-1).shape[0])

    # Tile sizing: rows of 128 lanes, split across `num_cores` grid slices.
    rows = pl.cdiv(batch, _LANES)
    rows_per_core = pl.cdiv(rows, num_cores)
    tile_rows = min(_round_up(max_tile_rows, 8), max(8, _round_up(rows_per_core, 8)))
    tiles_per_core = pl.cdiv(rows_per_core, tile_rows)
    rows_padded = num_cores * tiles_per_core * tile_rows
    padded_elems = rows_padded * _LANES

    def _prep(a):
        a = a.reshape(-1)
        if a.shape[0] != padded_elems:
            a = jnp.pad(a, (0, padded_elems - a.shape[0]))
        return a.reshape(rows_padded, _LANES)

    p1x, p2x, t1x, t2x = _prep(p1), _prep(p2), _prep(t1), _prep(t2)

    in_spec = lambda: pl.BlockSpec((tile_rows, _LANES),
                                   lambda c, i: (c * tiles_per_core + i, 0))

    partials = pl.pallas_call(
        _make_rank_loss_kernel(margin, batch, tile_rows, tiles_per_core, padded_elems),
        out_shape=jax.ShapeDtypeStruct((num_cores, 8, _LANES), jnp.float32),
        grid=(num_cores, tiles_per_core),
        in_specs=[in_spec(), in_spec(), in_spec(), in_spec()],
        out_specs=pl.BlockSpec((1, 8, _LANES), lambda c, i: (c, 0, 0)),
        scratch_shapes=[pltpu.VMEM((8, _LANES), jnp.float32)],
        compiler_params=pltpu.CompilerParams(
            dimension_semantics=("parallel", "arbitrary")),
    )(p1x, p2x, t1x, t2x)

    # Tiny (num_cores, 8, 128) cross-lane reduce + mean scaling done by XLA.
    return jnp.sum(partials) / jnp.float32(batch)


def rank_loss_ref(y_pred, y_true, margin: float):
    """Pure-JAX reference mirroring torch.nn.functional.margin_ranking_loss."""
    p1, p2 = y_pred
    t1, t2 = y_true
    target = jnp.where(t1 < t2, -1.0, 1.0).astype(p1.dtype)
    return jnp.mean(jnp.maximum(0.0, -target * (p1 - p2) + margin))


if __name__ == "__main__":
    margin = 0.5

    def make_inputs(key, b):
        k1, k2, k3, k4 = jax.random.split(key, 4)
        p1 = jax.random.normal(k1, (b, 1), dtype=jnp.float32)
        p2 = jax.random.normal(k2, (b, 1), dtype=jnp.float32)
        t1 = jax.random.uniform(k3, (b, 1), dtype=jnp.float32)
        t2 = jax.random.uniform(k4, (b, 1), dtype=jnp.float32)
        return (p1, p2), (t1, t2)

    # 1) tiny batch (single tile per core; second core's tile fully masked)
    y_pred, y_true = make_inputs(jax.random.PRNGKey(0), 8)
    loss = jax.block_until_ready(rank_loss(y_pred, y_true, margin))
    ref = rank_loss_ref(y_pred, y_true, margin)
    assert jnp.allclose(loss, ref, atol=1e-5, rtol=1e-5), (loss, ref)

    # 2) batch not a multiple of 128 (tail mask inside a partially filled tile)
    y_pred, y_true = make_inputs(jax.random.PRNGKey(1), 300)
    loss = jax.block_until_ready(rank_loss(y_pred, y_true, margin))
    ref = rank_loss_ref(y_pred, y_true, margin)
    assert jnp.allclose(loss, ref, atol=1e-5, rtol=1e-5), (loss, ref)

    # 3) multi-step grid (small tile_rows to exercise the per-core accumulator
    #    across several row tiles plus a fully masked trailing tile)
    y_pred, y_true = make_inputs(jax.random.PRNGKey(2), 3000)
    loss = jax.block_until_ready(rank_loss(y_pred, y_true, margin, max_tile_rows=8))
    ref = rank_loss_ref(y_pred, y_true, margin)
    assert jnp.allclose(loss, ref, atol=1e-5, rtol=1e-5), (loss, ref)

    print("KERNEL_OK")
</pallas_src>

<mosaic_0001>
module attributes {stable_mosaic.version = 11 : i64} {
  func.func @kernel(%arg0: i32, %arg1: i32, %arg2: memref<8x128xf32, #tpu.memory_space<vmem>>, %arg3: memref<8x128xf32, #tpu.memory_space<vmem>>, %arg4: memref<8x128xf32, #tpu.memory_space<vmem>>, %arg5: memref<8x128xf32, #tpu.memory_space<vmem>>, %arg6: memref<1x8x128xf32, #tpu.memory_space<vmem>>, %arg7: memref<8x128xf32, #tpu.memory_space<vmem>>) attributes {dimension_semantics = [#tpu.dimension_semantics<parallel>, #tpu.dimension_semantics<arbitrary>], iteration_bounds = array<i64: 2, 1>, scalar_prefetch = 0 : i64, scratch_operands = 1 : i64, tpu.core_type = #tpu.core_type<tc>, window_params = [{transform_indices = @transform_0, window_bounds = array<i64: 8, 128>}, {transform_indices = @transform_1, window_bounds = array<i64: 8, 128>}, {transform_indices = @transform_2, window_bounds = array<i64: 8, 128>}, {transform_indices = @transform_3, window_bounds = array<i64: 8, 128>}, {transform_indices = @transform_4, window_bounds = array<i64: 1, 8, 128>}]} {
    %c0_i32 = arith.constant 0 : i32
    %0 = arith.cmpi eq, %arg1, %c0_i32 : i32
    %1 = arith.extui %0 : i1 to i32
    %c0_i32_0 = arith.constant 0 : i32
    %2 = arith.cmpi ne, %1, %c0_i32_0 : i32
    scf.if %2 {
      %cst_17 = arith.constant 0.000000e+00 : f32
      %30 = vector.broadcast %cst_17 : f32 to vector<8x128xf32>
      %c0_18 = arith.constant 0 : index
      %c0_19 = arith.constant 0 : index
      %31 = vector.load %arg7[%c0_18, %c0_19] : memref<8x128xf32, #tpu.memory_space<vmem>>, vector<8x128xf32>
      tpu.vector_store %arg7[%c0_18, %c0_19], %30 {strides = array<i32>} : memref<8x128xf32, #tpu.memory_space<vmem>>, vector<8x128xf32>,
    } else {
    }
    %c0 = arith.constant 0 : index
    %c0_1 = arith.constant 0 : index
    %3 = vector.load %arg2[%c0, %c0_1] : memref<8x128xf32, #tpu.memory_space<vmem>>, vector<8x128xf32>
    %c0_2 = arith.constant 0 : index
    %c0_3 = arith.constant 0 : index
    %4 = vector.load %arg3[%c0_2, %c0_3] : memref<8x128xf32, #tpu.memory_space<vmem>>, vector<8x128xf32>
    %c0_4 = arith.constant 0 : index
    %c0_5 = arith.constant 0 : index
    %5 = vector.load %arg4[%c0_4, %c0_5] : memref<8x128xf32, #tpu.memory_space<vmem>>, vector<8x128xf32>
    %c0_6 = arith.constant 0 : index
    %c0_7 = arith.constant 0 : index
    %6 = vector.load %arg5[%c0_6, %c0_7] : memref<8x128xf32, #tpu.memory_space<vmem>>, vector<8x128xf32>
    %7 = arith.subf %3, %4 : vector<8x128xf32>
    %8 = arith.cmpf olt, %5, %6 : vector<8x128xf32>
    %cst = arith.constant 0.000000e+00 : f32
    %9 = vector.broadcast %cst : f32 to vector<8x128xf32>
    %10 = arith.subf %9, %7 : vector<8x128xf32>
    %11 = arith.select %8, %7, %10 : vector<8x128xi1>, vector<8x128xf32>
    %cst_8 = arith.constant 5.000000e-01 : f32
    %12 = vector.broadcast %cst_8 : f32 to vector<8x128xf32>
    %13 = arith.addf %11, %12 : vector<8x128xf32>
    %cst_9 = arith.constant 0.000000e+00 : f32
    %14 = vector.broadcast %cst_9 : f32 to vector<8x128xf32>
    %15 = arith.maximumf %13, %14 : vector<8x128xf32>
    %c1_i32 = arith.constant 1 : i32
    %16 = arith.muli %arg0, %c1_i32 : i32
    %17 = arith.addi %16, %arg1 : i32
    %c1024_i32 = arith.constant 1024 : i32
    %18 = arith.muli %17, %c1024_i32 : i32
    %c1024_i32_10 = arith.constant 1024 : i32
    %19 = arith.addi %18, %c1024_i32_10 : i32
    %c8_i32 = arith.constant 8 : i32
    %20 = arith.cmpi sle, %19, %c8_i32 : i32
    %21 = arith.extui %20 : i1 to i32
    %c0_i32_11 = arith.constant 0 : i32
    %22 = arith.cmpi ne, %21, %c0_i32_11 : i32
    scf.if %22 {
      %c0_17 = arith.constant 0 : index
      %c0_18 = arith.constant 0 : index
      %30 = vector.load %arg7[%c0_17, %c0_18] : memref<8x128xf32, #tpu.memory_space<vmem>>, vector<8x128xf32>
      %31 = vector.shape_cast %15 : vector<8x128xf32> to vector<1x8x128xf32>
      %cst_19 = arith.constant dense<0.000000e+00> : vector<8x128xf32>
      %32 = vector.multi_reduction <add>, %31, %cst_19 [0] : vector<1x8x128xf32> to vector<8x128xf32>
      %33 = arith.addf %30, %32 : vector<8x128xf32>
      %c0_20 = arith.constant 0 : index
      %c0_21 = arith.constant 0 : index
      %34 = vector.load %arg7[%c0_20, %c0_21] : memref<8x128xf32, #tpu.memory_space<vmem>>, vector<8x128xf32>
      tpu.vector_store %arg7[%c0_20, %c0_21], %33 {strides = array<i32>} : memref<8x128xf32, #tpu.memory_space<vmem>>, vector<8x128xf32>,
    } else {
    }
    %c1024_i32_12 = arith.constant 1024 : i32
    %23 = arith.addi %18, %c1024_i32_12 : i32
    %c8_i32_13 = arith.constant 8 : i32
    %24 = arith.cmpi sgt, %23, %c8_i32_13 : i32
    %25 = arith.extui %24 : i1 to i32
    %c0_i32_14 = arith.constant 0 : i32
    %26 = arith.cmpi ne, %25, %c0_i32_14 : i32
    scf.if %26 {
      %30 = tpu.iota {dimensions = array<i32: 0>} : vector<8x128xi32>
      %31 = tpu.iota {dimensions = array<i32: 1>} : vector<8x128xi32>
      %c128_i32 = arith.constant 128 : i32
      %32 = vector.broadcast %c128_i32 : i32 to vector<8x128xi32>
      %33 = arith.muli %30, %32 : vector<8x128xi32>
      %34 = arith.addi %33, %31 : vector<8x128xi32>
      %c8_i32_17 = arith.constant 8 : i32
      %35 = arith.subi %c8_i32_17, %18 : i32
      %36 = vector.broadcast %35 : i32 to vector<8x128xi32>
      %37 = arith.cmpi slt, %34, %36 : vector<8x128xi32>
      %cst_18 = arith.constant 0.000000e+00 : f32
      %38 = vector.broadcast %cst_18 : f32 to vector<8x128xf32>
      %39 = arith.select %37, %15, %38 : vector<8x128xi1>, vector<8x128xf32>
      %c0_19 = arith.constant 0 : index
      %c0_20 = arith.constant 0 : index
      %40 = vector.load %arg7[%c0_19, %c0_20] : memref<8x128xf32, #tpu.memory_space<vmem>>, vector<8x128xf32>
      %41 = vector.shape_cast %39 : vector<8x128xf32> to vector<1x8x128xf32>
      %cst_21 = arith.constant dense<0.000000e+00> : vector<8x128xf32>
      %42 = vector.multi_reduction <add>, %41, %cst_21 [0] : vector<1x8x128xf32> to vector<8x128xf32>
      %43 = arith.addf %40, %42 : vector<8x128xf32>
      %c0_22 = arith.constant 0 : index
      %c0_23 = arith.constant 0 : index
      %44 = vector.load %arg7[%c0_22, %c0_23] : memref<8x128xf32, #tpu.memory_space<vmem>>, vector<8x128xf32>
      tpu.vector_store %arg7[%c0_22, %c0_23], %43 {strides = array<i32>} : memref<8x128xf32, #tpu.memory_space<vmem>>, vector<8x128xf32>,
    } else {
    }
    %c0_i32_15 = arith.constant 0 : i32
    %27 = arith.cmpi eq, %arg1, %c0_i32_15 : i32
    %28 = arith.extui %27 : i1 to i32
    %c0_i32_16 = arith.constant 0 : i32
    %29 = arith.cmpi ne, %28, %c0_i32_16 : i32
    scf.if %29 {
      %c0_17 = arith.constant 0 : index
      %c0_18 = arith.constant 0 : index
      %30 = vector.load %arg7[%c0_17, %c0_18] : memref<8x128xf32, #tpu.memory_space<vmem>>, vector<8x128xf32>
      %c0_19 = arith.constant 0 : index
      %c0_20 = arith.constant 0 : index
      %c0_21 = arith.constant 0 : index
      %31 = vector.load %arg6[%c0_19, %c0_20, %c0_21] : memref<1x8x128xf32, #tpu.memory_space<vmem>>, vector<1x8x128xf32>
      %32 = vector.shape_cast %31 : vector<1x8x128xf32> to vector<8x128xf32>
      %33 = vector.shape_cast %30 : vector<8x128xf32> to vector<1x8x128xf32>
      tpu.vector_store %arg6[%c0_19, %c0_20, %c0_21], %33 {strides = array<i32>} : memref<1x8x128xf32, #tpu.memory_space<vmem>>, vector<1x8x128xf32>,
    } else {
    }
    return
  }
  func.func @transform_0(%arg0: i32, %arg1: i32) -> (i32, i32) {
    %c1_i32 = arith.constant 1 : i32
    %0 = arith.muli %arg0, %c1_i32 : i32
    %1 = arith.addi %0, %arg1 : i32
    %c0_i32 = arith.constant 0 : i32
    %c0_i32_0 = arith.constant 0 : i32
    return %1, %c0_i32 : i32, i32
  }
  func.func @transform_1(%arg0: i32, %arg1: i32) -> (i32, i32) {
    %c1_i32 = arith.constant 1 : i32
    %0 = arith.muli %arg0, %c1_i32 : i32
    %1 = arith.addi %0, %arg1 : i32
    %c0_i32 = arith.constant 0 : i32
    %c0_i32_0 = arith.constant 0 : i32
    return %1, %c0_i32 : i32, i32
  }
  func.func @transform_2(%arg0: i32, %arg1: i32) -> (i32, i32) {
    %c1_i32 = arith.constant 1 : i32
    %0 = arith.muli %arg0, %c1_i32 : i32
    %1 = arith.addi %0, %arg1 : i32
    %c0_i32 = arith.constant 0 : i32
    %c0_i32_0 = arith.constant 0 : i32
    return %1, %c0_i32 : i32, i32
  }
  func.func @transform_3(%arg0: i32, %arg1: i32) -> (i32, i32) {
    %c1_i32 = arith.constant 1 : i32
    %0 = arith.muli %arg0, %c1_i32 : i32
    %1 = arith.addi %0, %arg1 : i32
    %c0_i32 = arith.constant 0 : i32
    %c0_i32_0 = arith.constant 0 : i32
    return %1, %c0_i32 : i32, i32
  }
  func.func @transform_4(%arg0: i32, %arg1: i32) -> (i32, i32, i32) {
    %c0_i32 = arith.constant 0 : i32
    %c0_i32_0 = arith.constant 0 : i32
    %c0_i32_1 = arith.constant 0 : i32
    return %arg0, %c0_i32, %c0_i32_0 : i32, i32, i32
  }
}

</mosaic_0001>

<llo_original>
// kernel: tpu_custom_call.1
$region0: #{tpu_custom_call.1}
  #allocation0 [shape = 'u32[]', space=smem, size = 0x4, offset = 0x4, fixed_abs, tag = 'smem constant byte address 0x4 - core index']
  #allocation1 [shape = 'u32[144,128]{1,0:T(1,128)}', space=vmem, size = 0x12000, scoped, tag = 'internal scratch']
  #allocation2 [shape = 'f32[8,128]{1,0:T(8,128)}', space=vmem, size = 0x1000, scoped, tag = 'scratch operand']
  %s0 = inlined_call_operand.hbm [shape: f32[16,128], index: 0, kind: input, shape index: {}]
  %s1 = inlined_call_operand.hbm [shape: f32[16,128], index: 1, kind: input, shape index: {}]
  %s2 = inlined_call_operand.hbm [shape: f32[16,128], index: 2, kind: input, shape index: {}]
  %s3 = inlined_call_operand.hbm [shape: f32[16,128], index: 3, kind: input, shape index: {}]
  %s4 = inlined_call_operand.hbm [shape: f32[2,8,128], index: 4, kind: output, shape index: {}]
  %s5 = sld [smem:[#allocation0]]
  $region81: #{tpu_custom_call.1} parent=0
    _
  %s7 = ssub.s32 1, %s5
  %s8 = scalar_select 0, %s7, %s5
  $region1: #{tpu_custom_call.1} parent=0
    #allocation3 [shape = 'u8[8192]{0}', space=vmem, size = 0x2000, scoped, tag = 'input window, operand 0']
    #allocation4 [shape = 's32[2]{0}', space=sflag, size = 0x8, scoped, tag = 'scoped memory for tpu_custom_call.1']
    #allocation5 [shape = 's32[2]{0}', space=sflag, size = 0x8, scoped, tag = 'scoped memory for tpu_custom_call.1']
    #allocation6 [shape = 'u8[8192]{0}', space=vmem, size = 0x2000, scoped, tag = 'input window, operand 1']
    #allocation7 [shape = 's32[2]{0}', space=sflag, size = 0x8, scoped, tag = 'scoped memory for tpu_custom_call.1']
    #allocation8 [shape = 'u8[8192]{0}', space=vmem, size = 0x2000, scoped, tag = 'input window, operand 2']
    #allocation9 [shape = 'u8[8192]{0}', space=vmem, size = 0x2000, scoped, tag = 'input window, operand 3']
    #allocation10 [shape = 's32[2]{0}', space=sflag, size = 0x8, scoped, tag = 'scoped memory for tpu_custom_call.1']
    #allocation11 [shape = 'u8[8192]{0}', space=vmem, size = 0x2000, scoped, tag = 'output window, operand 0']
    %9 = vsyncpa [#allocation4], 0
    %s10 = scalar_lea.sflag [#allocation4], 1
    %11 = vsyncpa %s10, 0
    %12 = vsyncpa [#allocation7], 0
    %s13 = scalar_lea.sflag [#allocation7], 1
    %14 = vsyncpa %s13, 0
    %15 = vsyncpa [#allocation10], 0
    %s16 = scalar_lea.sflag [#allocation10], 1
    %17 = vsyncpa %s16, 0
    %18 = vsyncpa [#allocation5], 0
    %s19 = scalar_lea.sflag [#allocation5], 1
    %20 = vsyncpa %s19, 0
    loop: start=0, step=1, limit=4
    $region2: #{tpu_custom_call.1} parent=1 // loop_pre_header
      _
    $region3: #{tpu_custom_call.1} parent=1 // loop_header
      %s22 = sphi 0, %s26
      %p23 = scmp.ge.s32.totalorder %s22, 4
      %s29 = sphi 0, %s41
      %s30 = sphi 0, %s37
      %s31 = sphi 0, %s29
      %s32 = sphi 0, %s30
      %s33 = sphi 0, %s31
      %s34 = sphi 0, %s32
      %s46 = sphi 0, %s48
      %s49 = sphi 0, %s46
      %s50 = sphi 0, %s49
      %s66 = sphi 0, %s50
      %s74 = sphi 0, %s76
      %s77 = sphi 0, %s74
      %s78 = sphi 0, %s77
      %s94 = sphi 0, %s78
      %s102 = sphi 0, %s104
      %s105 = sphi 0, %s102
      %s106 = sphi 0, %s105
      %s122 = sphi 0, %s106
      %s130 = sphi 0, %s132
      %s133 = sphi 0, %s130
      %s134 = sphi 0, %s133
      %s150 = sphi 0, %s134
      %s156 = sphi 0, %s158
      %s159 = sphi 0, %s156
      %s160 = sphi 0, %s159
      %s176 = sphi 0, %s160
    $region4: #{tpu_custom_call.1} parent=1 // loop_header_branch
      %25 = sbr.rel (%p23) target = $region8
    $region5: #{tpu_custom_call.1} parent=1 // loop_body
      %s27 = ssub.s32 %s22, 1
      %s28 = ssub.s32 %s22, 2
      %s35 = sadd.s32 1, %s30
      %p36 = scmp.ge.s32.totalorder %s35, 1
      %s37 = scalar_select %p36, 0, %s35
      %s38 = sadd.s32 1, %s29
      %s39 = scalar_select %p36, %s38, %s29
      %p40 = scmp.ge.s32.totalorder %s39, 2
      %s41 = scalar_select %p40, 0, %s39
      %s42 = sadd.s32 %s29, %s30
      %s43 = sadd.s32 %s41, %s37
      %s44 = ssub.s32 %s42, %s43
      %p45 = scmp.eq.s32.totalorder %s44, 0
      %s47 = sadd.s32 %s46, 1
      %s48 = scalar_select %p45, %s46, %s47
      %p51 = pneg %p45
      %p52 = scmp.eq.s32.totalorder %s22, 1
      %p53 = por %p51, %p52
      %p54 = scmp.ne.s32.totalorder %s46, %s49
      %p55 = scmp.eq.s32.totalorder %s22, 0
      %p56 = por %p54, %p55
      %p57 = scmp.ne.s32.totalorder %s46, %s49
      %p58 = scmp.eq.s32.totalorder %s27, 1
      %p59 = por %p57, %p58
      %p60 = scmp.ne.s32.totalorder %s49, %s50
      %p61 = scmp.eq.s32.totalorder %s27, 0
      %p62 = por %p60, %p61
      %p63 = scmp.ne.s32.totalorder %s49, %s50
      %p64 = scmp.eq.s32.totalorder %s28, 1
      %p65 = por %p63, %p64
      %p67 = scmp.ne.s32.totalorder %s50, %s66
      %p68 = scmp.eq.s32.totalorder %s28, 0
      %p69 = por %p67, %p68
      %s70 = sadd.s32 %s29, %s30
      %s71 = sadd.s32 %s41, %s37
      %s72 = ssub.s32 %s70, %s71
      %p73 = scmp.eq.s32.totalorder %s72, 0
      %s75 = sadd.s32 %s74, 1
      %s76 = scalar_select %p73, %s74, %s75
      %p79 = pneg %p73
      %p80 = scmp.eq.s32.totalorder %s22, 1
      %p81 = por %p79, %p80
      %p82 = scmp.ne.s32.totalorder %s74, %s77
      %p83 = scmp.eq.s32.totalorder %s22, 0
      %p84 = por %p82, %p83
      %p85 = scmp.ne.s32.totalorder %s74, %s77
      %p86 = scmp.eq.s32.totalorder %s27, 1
      %p87 = por %p85, %p86
      %p88 = scmp.ne.s32.totalorder %s77, %s78
      %p89 = scmp.eq.s32.totalorder %s27, 0
      %p90 = por %p88, %p89
      %p91 = scmp.ne.s32.totalorder %s77, %s78
      %p92 = scmp.eq.s32.totalorder %s28, 1
      %p93 = por %p91, %p92
      %p95 = scmp.ne.s32.totalorder %s78, %s94
      %p96 = scmp.eq.s32.totalorder %s28, 0
      %p97 = por %p95, %p96
      %s98 = sadd.s32 %s29, %s30
      %s99 = sadd.s32 %s41, %s37
      %s100 = ssub.s32 %s98, %s99
      %p101 = scmp.eq.s32.totalorder %s100, 0
      %s103 = sadd.s32 %s102, 1
      %s104 = scalar_select %p101, %s102, %s103
      %p107 = pneg %p101
      %p108 = scmp.eq.s32.totalorder %s22, 1
      %p109 = por %p107, %p108
      %p110 = scmp.ne.s32.totalorder %s102, %s105
      %p111 = scmp.eq.s32.totalorder %s22, 0
      %p112 = por %p110, %p111
      %p113 = scmp.ne.s32.totalorder %s102, %s105
      %p114 = scmp.eq.s32.totalorder %s27, 1
      %p115 = por %p113, %p114
      %p116 = scmp.ne.s32.totalorder %s105, %s106
      %p117 = scmp.eq.s32.totalorder %s27, 0
      %p118 = por %p116, %p117
      %p119 = scmp.ne.s32.totalorder %s105, %s106
      %p120 = scmp.eq.s32.totalorder %s28, 1
      %p121 = por %p119, %p120
      %p123 = scmp.ne.s32.totalorder %s106, %s122
      %p124 = scmp.eq.s32.totalorder %s28, 0
      %p125 = por %p123, %p124
      %s126 = sadd.s32 %s29, %s30
      %s127 = sadd.s32 %s41, %s37
      %s128 = ssub.s32 %s126, %s127
      %p129 = scmp.eq.s32.totalorder %s128, 0
      %s131 = sadd.s32 %s130, 1
      %s132 = scalar_select %p129, %s130, %s131
      %p135 = pneg %p129
      %p136 = scmp.eq.s32.totalorder %s22, 1
      %p137 = por %p135, %p136
      %p138 = scmp.ne.s32.totalorder %s130, %s133
      %p139 = scmp.eq.s32.totalorder %s22, 0
      %p140 = por %p138, %p139
      %p141 = scmp.ne.s32.totalorder %s130, %s133
      %p142 = scmp.eq.s32.totalorder %s27, 1
      %p143 = por %p141, %p142
      %p144 = scmp.ne.s32.totalorder %s133, %s134
      %p145 = scmp.eq.s32.totalorder %s27, 0
      %p146 = por %p144, %p145
      %p147 = scmp.ne.s32.totalorder %s133, %s134
      %p148 = scmp.eq.s32.totalorder %s28, 1
      %p149 = por %p147, %p148
      %p151 = scmp.ne.s32.totalorder %s134, %s150
      %p152 = scmp.eq.s32.totalorder %s28, 0
      %p153 = por %p151, %p152
      %s154 = ssub.s32 %s29, %s41
      %p155 = scmp.eq.s32.totalorder %s154, 0
      %s157 = sadd.s32 %s156, 1
      %s158 = scalar_select %p155, %s156, %s157
      %p161 = pneg %p155
      %p162 = scmp.eq.s32.totalorder %s22, 1
      %p163 = por %p161, %p162
      %p164 = scmp.ne.s32.totalorder %s156, %s159
      %p165 = scmp.eq.s32.totalorder %s22, 0
      %p166 = por %p164, %p165
      %p167 = scmp.ne.s32.totalorder %s156, %s159
      %p168 = scmp.eq.s32.totalorder %s27, 1
      %p169 = por %p167, %p168
      %p170 = scmp.ne.s32.totalorder %s159, %s160
      %p171 = scmp.eq.s32.totalorder %s27, 0
      %p172 = por %p170, %p171
      %p173 = scmp.ne.s32.totalorder %s159, %s160
      %p174 = scmp.eq.s32.totalorder %s28, 1
      %p175 = por %p173, %p174
      %p177 = scmp.ne.s32.totalorder %s160, %s176
      %p178 = scmp.eq.s32.totalorder %s28, 0
      %p179 = por %p177, %p178
      %p180 = scmp.le.s32.totalorder 1, %s22
      %p181 = scmp.lt.s32.totalorder %s22, 3
      %p182 = pnand %p180, %p181
      %p183 = pneg %p182
      // Predicated region
      $region9: #{tpu_custom_call.1} parent=5 // pred_check
        _
      $region10: #{tpu_custom_call.1} parent=5 // pred_check_branch
        %185 = sbr.rel (%p182) target = $region12
      $region11: #{tpu_custom_call.1} parent=5 // pred_region
        %s186 = ssub.s32 %s22, 1
      $region12: #{tpu_custom_call.1} parent=5 // pred_fallthru
        _
      %p187 = scmp.lt.s32.totalorder %s22, 2
      // Predicated region
      $region13: #{tpu_custom_call.1} parent=5 // pred_check
        %p188 = pneg %p187
      $region14: #{tpu_custom_call.1} parent=5 // pred_check_branch
        %190 = sbr.rel (%p188) target = $region16
      $region15: #{tpu_custom_call.1} parent=5 // pred_region
        // Predicated region
        $region17: #{tpu_custom_call.1} parent=15 // pred_check
          %p191 = pneg %p56
        $region18: #{tpu_custom_call.1} parent=15 // pred_check_branch
          %193 = sbr.rel (%p191) target = $region20
        $region19: #{tpu_custom_call.1} parent=15 // pred_region
          %s194 = sand.u32 %s46, 1
          %s195 = scalar_lea.sflag [#allocation4], %s194
          %s196 = sand.u32 %s46, 1
          %s197 = smul.addr %s196, 8
          %s198 = scalar_lea.vmem [#allocation3], %s197
          %s199 = sadd.s32 %s29, %s30
          %s201 = ssub.s32 128, 128
          %202 = vsyncadd %s195, %s201
          %s203 = smul.addr %s199, 128
          %s204 = scalar_lea.hbm %s0, %s203
          %s206 = sshll.u32 %s198, 4
          %s207 = int_to_ptr.vmem [resolvable:$true] %s206
          %209 = dma.hbm_to_vmem [thread:$0]  %s204, 128, %s207, %s195
        $region20: #{tpu_custom_call.1} parent=15 // pred_fallthru
          _
        // Predicated region
        $region21: #{tpu_custom_call.1} parent=15 // pred_check
          %p210 = pneg %p84
        $region22: #{tpu_custom_call.1} parent=15 // pred_check_branch
          %212 = sbr.rel (%p210) target = $region24
        $region23: #{tpu_custom_call.1} parent=15 // pred_region
          %s213 = sand.u32 %s22, 1
          %s214 = scalar_lea.sflag [#allocation7], %s213
          %s215 = sand.u32 %s74, 1
          %s216 = smul.addr %s215, 8
          %s217 = scalar_lea.vmem [#allocation6], %s216
          %s218 = sadd.s32 %s29, %s30
          %s220 = ssub.s32 128, 128
          %221 = vsyncadd %s214, %s220
          %s222 = smul.addr %s218, 128
          %s223 = scalar_lea.hbm %s1, %s222
          %s225 = sshll.u32 %s217, 4
          %s226 = int_to_ptr.vmem [resolvable:$true] %s225
          %228 = dma.hbm_to_vmem [thread:$0]  %s223, 128, %s226, %s214
        $region24: #{tpu_custom_call.1} parent=15 // pred_fallthru
          _
        // Predicated region
        $region25: #{tpu_custom_call.1} parent=15 // pred_check
          %p229 = pneg %p112
        $region26: #{tpu_custom_call.1} parent=15 // pred_check_branch
          %231 = sbr.rel (%p229) target = $region28
        $region27: #{tpu_custom_call.1} parent=15 // pred_region
          %s232 = sand.u32 %s22, 1
          %s233 = scalar_lea.sflag [#allocation7], %s232
          %s234 = sand.u32 %s102, 1
          %s235 = smul.addr %s234, 8
          %s236 = scalar_lea.vmem [#allocation8], %s235
          %s237 = sadd.s32 %s29, %s30
          %s239 = ssub.s32 128, 128
          %240 = vsyncadd %s233, %s239
          %s241 = smul.addr %s237, 128
          %s242 = scalar_lea.hbm %s2, %s241
          %s244 = sshll.u32 %s236, 4
          %s245 = int_to_ptr.vmem [resolvable:$true] %s244
          %247 = dma.hbm_to_vmem [thread:$0]  %s242, 128, %s245, %s233
        $region28: #{tpu_custom_call.1} parent=15 // pred_fallthru
          _
        // Predicated region
        $region29: #{tpu_custom_call.1} parent=15 // pred_check
          %p248 = pneg %p140
        $region30: #{tpu_custom_call.1} parent=15 // pred_check_branch
          %250 = sbr.rel (%p248) target = $region32
        $region31: #{tpu_custom_call.1} parent=15 // pred_region
          %s251 = sand.u32 %s130, 1
          %s252 = scalar_lea.sflag [#allocation10], %s251
          %s253 = sand.u32 %s130, 1
          %s254 = smul.addr %s253, 8
          %s255 = scalar_lea.vmem [#allocation9], %s254
          %s256 = sadd.s32 %s29, %s30
          %s258 = ssub.s32 128, 128
          %259 = vsyncadd %s252, %s258
          %s260 = smul.addr %s256, 128
          %s261 = scalar_lea.hbm %s3, %s260
          %s263 = sshll.u32 %s255, 4
          %s264 = int_to_ptr.vmem [resolvable:$true] %s263
          %266 = dma.hbm_to_vmem [thread:$0]  %s261, 128, %s264, %s252
        $region32: #{tpu_custom_call.1} parent=15 // pred_fallthru
          _
      $region16: #{tpu_custom_call.1} parent=5 // pred_fallthru
        _
      %p267 = scmp.le.s32.totalorder 1, %s22
      %p268 = scmp.lt.s32.totalorder %s22, 3
      %p269 = pnand %p267, %p268
      %p270 = pneg %p269
      // Predicated region
      $region33: #{tpu_custom_call.1} parent=5 // pred_check
        _
      $region34: #{tpu_custom_call.1} parent=5 // pred_check_branch
        %272 = sbr.rel (%p269) target = $region36
      $region35: #{tpu_custom_call.1} parent=5 // pred_region
        %s273 = ssub.s32 %s22, 1
        %s274 = sand.u32 %s49, 1
        %s275 = scalar_lea.sflag [#allocation4], %s274
        %s276 = sand.u32 %s49, 1
        %s277 = smul.addr %s276, 8
        %s278 = scalar_lea.vmem [#allocation3], %s277
        // Predicated region
        $region37: #{tpu_custom_call.1} parent=35 // pred_check
          %p279 = pneg %p62
        $region38: #{tpu_custom_call.1} parent=35 // pred_check_branch
          %281 = sbr.rel (%p279) target = $region40
        $region39: #{tpu_custom_call.1} parent=35 // pred_region
          %282 = dma.done %s275, 128
        $region40: #{tpu_custom_call.1} parent=35 // pred_fallthru
          _
        %s283 = sand.u32 %s27, 1
        %s284 = scalar_lea.sflag [#allocation7], %s283
        %s285 = sand.u32 %s77, 1
        %s286 = smul.addr %s285, 8
        %s287 = scalar_lea.vmem [#allocation6], %s286
        // Predicated region
        $region41: #{tpu_custom_call.1} parent=35 // pred_check
          %p288 = pneg %p90
        $region42: #{tpu_custom_call.1} parent=35 // pred_check_branch
          %290 = sbr.rel (%p288) target = $region44
        $region43: #{tpu_custom_call.1} parent=35 // pred_region
          %291 = dma.done %s284, 128
        $region44: #{tpu_custom_call.1} parent=35 // pred_fallthru
          _
        %s292 = sand.u32 %s27, 1
        %s293 = scalar_lea.sflag [#allocation7], %s292
        %s294 = sand.u32 %s105, 1
        %s295 = smul.addr %s294, 8
        %s296 = scalar_lea.vmem [#allocation8], %s295
        // Predicated region
        $region45: #{tpu_custom_call.1} parent=35 // pred_check
          %p297 = pneg %p118
        $region46: #{tpu_custom_call.1} parent=35 // pred_check_branch
          %299 = sbr.rel (%p297) target = $region48
        $region47: #{tpu_custom_call.1} parent=35 // pred_region
          %300 = dma.done %s293, 128
        $region48: #{tpu_custom_call.1} parent=35 // pred_fallthru
          _
        %s301 = sand.u32 %s133, 1
        %s302 = scalar_lea.sflag [#allocation10], %s301
        %s303 = sand.u32 %s133, 1
        %s304 = smul.addr %s303, 8
        %s305 = scalar_lea.vmem [#allocation9], %s304
        // Predicated region
        $region49: #{tpu_custom_call.1} parent=35 // pred_check
          %p306 = pneg %p146
        $region50: #{tpu_custom_call.1} parent=35 // pred_check_branch
          %308 = sbr.rel (%p306) target = $region52
        $region51: #{tpu_custom_call.1} parent=35 // pred_region
          %309 = dma.done %s302, 128
        $region52: #{tpu_custom_call.1} parent=35 // pred_fallthru
          _
        %s310 = sand.u32 %s49, 1
        %s311 = scalar_lea.sflag [#allocation4], %s310
        %s312 = sand.u32 %s49, 1
        %s313 = smul.addr %s312, 8
        %s314 = scalar_lea.vmem [#allocation3], %s313
        %p315 = pneg %p62
        %p316 = pneg %p59
        %s317 = sand.u32 %s27, 1
        %s318 = scalar_lea.sflag [#allocation7], %s317
        %s319 = sand.u32 %s77, 1
        %s320 = smul.addr %s319, 8
        %s321 = scalar_lea.vmem [#allocation6], %s320
        %p322 = pneg %p90
        %p323 = pneg %p87
        %s324 = sand.u32 %s27, 1
        %s325 = scalar_lea.sflag [#allocation7], %s324
        %s326 = sand.u32 %s105, 1
        %s327 = smul.addr %s326, 8
        %s328 = scalar_lea.vmem [#allocation8], %s327
        %p329 = pneg %p118
        %p330 = pneg %p115
        %s331 = sand.u32 %s133, 1
        %s332 = scalar_lea.sflag [#allocation10], %s331
        %s333 = sand.u32 %s133, 1
        %s334 = smul.addr %s333, 8
        %s335 = scalar_lea.vmem [#allocation9], %s334
        %p336 = pneg %p146
        %p337 = pneg %p143
        %p338 = pneg %p172
        %p339 = pneg %p169
        %s340 = sand.u32 %s159, 1
        %s341 = scalar_lea.sflag [#allocation5], %s340
        %s342 = sand.u32 %s159, 1
        %s343 = smul.addr %s342, 8
        %s344 = scalar_lea.vmem [#allocation11], %s343
        %s345 = sadd.s32 %s31, %s32
        %s346 = sadd.s32 %s31, %s32
        %s347 = sadd.s32 %s31, %s32
        %s348 = sadd.s32 %s31, %s32
        %p349 = scmp.eq.s32.totalorder %s32, 0
        // Predicated region
        $region53: #{tpu_custom_call.1} parent=35 // pred_check
          %p350 = pneg %p349
        $region54: #{tpu_custom_call.1} parent=35 // pred_check_branch
          %352 = sbr.rel (%p350) target = $region56
        $region55: #{tpu_custom_call.1} parent=35 // pred_region
          %353 = vst [vmem:[#allocation2] sm:$0xff] 0.0
        $region56: #{tpu_custom_call.1} parent=35 // pred_fallthru
          _
        %v354 = vld [vmem:[%s278] sm:$0xff]
        %v355 = vld [vmem:[%s287] sm:$0xff]
        %v356 = vld [vmem:[%s296] sm:$0xff]
        %v357 = vld [vmem:[%s305] sm:$0xff]
        %v358 = vsub.f32 %v354, %v355
        %vm359 = vcmp.lt.f32.partialorder %v356, %v357
        %v360 = vsub.f32 0.0, %v358
        %v361 = vsel %vm359, %v358, %v360
        %v362 = vadd.f32 %v361, 0.5
        %v363 = vmax.f32 %v362, 0.0
        %s364 = sadd.s32 %s31, %s32
        %s365 = smul.u32 %s364, 1024
        %s366 = sadd.s32 %s365, 1024
        %p367 = scmp.le.s32.totalorder %s366, 8
        // Predicated region
        $region57: #{tpu_custom_call.1} parent=35 // pred_check
          %p368 = pneg %p367
        $region58: #{tpu_custom_call.1} parent=35 // pred_check_branch
          %370 = sbr.rel (%p368) target = $region60
        $region59: #{tpu_custom_call.1} parent=35 // pred_region
          %v371 = vld [vmem:[#allocation2] sm:$0xff]
          %v372 = vadd.f32 %v363, 0.0
          %v373 = vadd.f32 %v371, %v372
          %374 = vst [vmem:[#allocation2] sm:$0xff] %v373
        $region60: #{tpu_custom_call.1} parent=35 // pred_fallthru
          _
        %p375 = scmp.gt.s32.totalorder %s366, 8
        // Predicated region
        $region61: #{tpu_custom_call.1} parent=35 // pred_check
          %p376 = pneg %p375
        $region62: #{tpu_custom_call.1} parent=35 // pred_check_branch
          %378 = sbr.rel (%p376) target = $region64
        $region63: #{tpu_custom_call.1} parent=35 // pred_region
          %v379 = vlaneseq
          %v380 = vshrl.u32 %v379, 7
          %v381 = vlaneseq
          %v382 = vand.u32 %v381, 127
          %v383 = vmul.u32 %v380, 128
          %v384 = vadd.s32 %v383, %v382
          %s385 = ssub.s32 8, %s365
          %v386 = vstv %s385
          %vm387 = vcmp.lt.s32.totalorder %v384, %v386
          %v388 = vsel %vm387, %v363, 0.0
          %v389 = vld [vmem:[#allocation2] sm:$0xff]
          %v390 = vadd.f32 %v388, 0.0
          %v391 = vadd.f32 %v389, %v390
          %392 = vst [vmem:[#allocation2] sm:$0xff] %v391
        $region64: #{tpu_custom_call.1} parent=35 // pred_fallthru
          _
        // Predicated region
        $region65: #{tpu_custom_call.1} parent=35 // pred_check
          %p393 = pneg %p349
        $region66: #{tpu_custom_call.1} parent=35 // pred_check_branch
          %395 = sbr.rel (%p393) target = $region68
        $region67: #{tpu_custom_call.1} parent=35 // pred_region
          %v396 = vld [vmem:[#allocation2] sm:$0xff]
          %397 = vst [vmem:[%s344] sm:$0xff] %v396
        $region68: #{tpu_custom_call.1} parent=35 // pred_fallthru
          _
        %s398 = sand.u32 %s159, 1
        %s399 = scalar_lea.sflag [#allocation5], %s398
        %s400 = sand.u32 %s159, 1
        %s401 = smul.addr %s400, 8
        %s402 = scalar_lea.vmem [#allocation11], %s401
        // Predicated region
        $region69: #{tpu_custom_call.1} parent=35 // pred_check
          %p403 = pneg %p169
        $region70: #{tpu_custom_call.1} parent=35 // pred_check_branch
          %405 = sbr.rel (%p403) target = $region72
        $region71: #{tpu_custom_call.1} parent=35 // pred_region
          %s407 = ssub.s32 128, 128
          %408 = vsyncadd %s399, %s407
          %s409 = smul.addr %s31, 128
          %s410 = scalar_lea.hbm %s4, %s409
          %s412 = sshll.u32 %s402, 4
          %s413 = int_to_ptr.vmem [resolvable:$true] %s412
          %415 = dma.vmem_to_hbm [thread:$0]  %s413, 128, %s410, %s399
        $region72: #{tpu_custom_call.1} parent=35 // pred_fallthru
          _
      $region36: #{tpu_custom_call.1} parent=5 // pred_fallthru
        _
      %p416 = scmp.le.s32.totalorder 2, %s22
      // Predicated region
      $region73: #{tpu_custom_call.1} parent=5 // pred_check
        %p417 = pneg %p416
      $region74: #{tpu_custom_call.1} parent=5 // pred_check_branch
        %419 = sbr.rel (%p417) target = $region76
      $region75: #{tpu_custom_call.1} parent=5 // pred_region
        %s420 = ssub.s32 %s22, 2
        // Predicated region
        $region77: #{tpu_custom_call.1} parent=75 // pred_check
          %p421 = pneg %p175
        $region78: #{tpu_custom_call.1} parent=75 // pred_check_branch
          %423 = sbr.rel (%p421) target = $region80
        $region79: #{tpu_custom_call.1} parent=75 // pred_region
          %s424 = sand.u32 %s160, 1
          %s425 = scalar_lea.sflag [#allocation5], %s424
          %s426 = sand.u32 %s160, 1
          %s427 = smul.addr %s426, 8
          %s428 = scalar_lea.vmem [#allocation11], %s427
          %429 = dma.done %s425, 128
        $region80: #{tpu_custom_call.1} parent=75 // pred_fallthru
          _
      $region76: #{tpu_custom_call.1} parent=5 // pred_fallthru
        _
    $region6: #{tpu_custom_call.1} parent=1 // loop_footer
      %s26 = sadd.s32 1, %s22
    $region7: #{tpu_custom_call.1} parent=1 // loop_footer_branch
      %21 = sbr.rel target = $region3
    $region8: #{tpu_custom_call.1} parent=1 // loop_exit
      _
    %430 = vsyncpa [#allocation4], 1
    %s431 = scalar_lea.sflag [#allocation4], 1
    %432 = vsyncpa %s431, 1
    %433 = vsyncpa [#allocation7], 1
    %s434 = scalar_lea.sflag [#allocation7], 1
    %435 = vsyncpa %s434, 1
    %436 = vsyncpa [#allocation10], 1
    %s437 = scalar_lea.sflag [#allocation10], 1
    %438 = vsyncpa %s437, 1
    %439 = vsyncpa [#allocation5], 1
    %s440 = scalar_lea.sflag [#allocation5], 1
    %441 = vsyncpa %s440, 1

</llo_original>
